<compile_context>
chip_gen: v7x
topology: tpu7x:2x2x1
jax: 0.10.0
libtpu: 0.0.40
codegen_flags: <defaults>
</compile_context>

<pallas_src>
import jax
import jax.numpy as jnp
from jax.experimental import pallas as pl
from jax.experimental.pallas import tpu as pltpu

_NEG_INF = -1e30


def _add_edges_kernel(g_ref, hv_ref, w_ref, b_ref, logsm_ref):
    """Fused: implicit-concat 3-layer MLP + log_softmax.

    g_ref:     (1, graph_dim)  f32   graph embedding
    hv_ref:    (N, node_dim)   f32   node embeddings; row N-1 is the current node
    w_ref:     (3, mid, mid)   bf16  [W1 ; W2 ; W3 col-padded to mid]
    b_ref:     (3, mid)        f32   [b1 ; b2 ; b3 padded with -1e30]
    logsm_ref: (M, mid)        f32   log_softmax(logits); cols >= E+1 are padding
    """
    M = logsm_ref.shape[0]
    graph_dim = g_ref.shape[1]
    node_dim = hv_ref.shape[1]

    # bf16 cast of the (tiny) activations happens in-kernel, not as wrapper HLOs.
    g = g_ref[...].astype(jnp.bfloat16)                          # (1, Gd)
    prev = hv_ref[pl.ds(0, M), :].astype(jnp.bfloat16)           # (M, Nd)
    curr = hv_ref[pl.ds(M, 1), :].astype(jnp.bfloat16)           # (1, Nd)

    # W1 row blocks matching concat([graph_embed, prev, curr]) along features.
    w1_g = w_ref[0, pl.ds(0, graph_dim), :]                      # (Gd, mid)
    w1_p = w_ref[0, pl.ds(graph_dim, node_dim), :]               # (Nd, mid)
    w1_c = w_ref[0, pl.ds(graph_dim + node_dim, node_dim), :]    # (Nd, mid)

    # Row-constant terms folded into an effective bias (two 1-row dots), so the
    # row-varying matmul only has K = node_dim.
    eff_b1 = (b_ref[pl.ds(0, 1), :]
              + jnp.dot(g, w1_g, preferred_element_type=jnp.float32)
              + jnp.dot(curr, w1_c, preferred_element_type=jnp.float32))    # (1, mid)

    h1 = jnp.dot(prev, w1_p, preferred_element_type=jnp.float32) + eff_b1   # (M, mid)
    h1 = jnp.maximum(h1, 0.0).astype(jnp.bfloat16)
    h2 = jnp.dot(h1, w_ref[1], preferred_element_type=jnp.float32) + b_ref[pl.ds(1, 1), :]
    h2 = jnp.maximum(h2, 0.0).astype(jnp.bfloat16)
    logits = jnp.dot(h2, w_ref[2], preferred_element_type=jnp.float32) + b_ref[pl.ds(2, 1), :]

    # Padded columns carry a -1e30 bias -> exp underflows to exactly 0, so the
    # LSE (and log_softmax of the real columns) matches the unpadded math.
    m = jnp.max(logits, axis=-1, keepdims=True)
    z = logits - m
    lse = jnp.log(jnp.sum(jnp.exp(z), axis=-1, keepdims=True))
    logsm_ref[...] = z - lse                                      # (M, mid) f32


def prepare_params(params):
    """One-time conversion of the f32 Linear params into kernel-ready form.

    Returns (w_all, b_all, num_out):
      w_all: (3, mid, mid) bf16  stacked [W1; W2; W3 column-padded with zeros]
      b_all: (3, mid)      f32   stacked [b1; b2; b3 column-padded with -1e30]
    Padded output columns contribute exp(-1e30)=0 to the softmax normalizer,
    so slicing the kernel output to [:, :num_out] recovers the exact result.
    """
    w1, b1, w2, b2, w3, b3 = params
    mid = w1.shape[0]
    num_out = w3.shape[1]
    assert w1.shape == (mid, mid) and w2.shape == (mid, mid) and w3.shape[0] == mid
    assert mid % 8 == 0, "mid (graph_dim + 2*node_dim) must be sublane-aligned"
    assert num_out <= mid, "num_edge_types + 1 must fit in the hidden width"

    pad = mid - num_out
    w3p = jnp.pad(w3, ((0, 0), (0, pad)))
    b3p = jnp.pad(b3.reshape(1, -1), ((0, 0), (0, pad)), constant_values=_NEG_INF)

    w_all = jnp.stack([w1, w2, w3p]).astype(jnp.bfloat16)                 # (3, mid, mid)
    b_all = jnp.concatenate([b1.reshape(1, -1), b2.reshape(1, -1), b3p],
                            axis=0).astype(jnp.float32)                   # (3, mid)
    return w_all, b_all, num_out


def add_edges_forward(hv, graph_embed, kparams, actions=None, key=None):
    """Functional equivalent of AddEdges.forward (tensor part only).

    hv:          (N, node_dim) node embeddings (g.ndata['hv']); row N-1 = current node
    graph_embed: (graph_dim,)  output of graph_embed_func(g) (computed as glue)
    kparams:     output of prepare_params()
    actions:     optional (N-1,) int array; sampled from the logits if None
    returns (actions, log_prob)
    """
    w_all, b_all, num_out = kparams
    N = hv.shape[0]
    M = N - 1
    mid = w_all.shape[1]

    vmem = pl.BlockSpec(memory_space=pltpu.MemorySpace.VMEM)
    logsm = pl.pallas_call(
        _add_edges_kernel,
        out_shape=jax.ShapeDtypeStruct((M, mid), jnp.float32),
        in_specs=[vmem] * 4,
        out_specs=vmem,
    )(graph_embed.reshape(1, -1), hv, w_all, b_all)
    logsm = logsm[:, :num_out]                                   # (M, E+1)

    if actions is None:
        # log_softmax is a valid logits vector for Categorical (shift invariance)
        actions = jax.random.categorical(key, logsm, axis=-1)
    actions = jnp.asarray(actions, jnp.int32).reshape(M)

    # tiny (M, E+1) gather + sum: cheaper as wrapper ops than a second output
    log_prob = jnp.take_along_axis(logsm, actions[:, None], axis=1).sum()

    # TODO(synk): DGL graph mutation (g.add_edges + edge-feature 'he' one-hot
    # assignment) is host-side graph bookkeeping with no Pallas equivalent.
    return actions, log_prob


def init_params(key, graph_dim, node_dim, num_edge_types):
    mid = graph_dim + 2 * node_dim
    ks = jax.random.split(key, 6)

    def lin(kw, kb, din, dout):
        bound = 1.0 / (din ** 0.5)
        w = jax.random.uniform(kw, (din, dout), jnp.float32, -bound, bound)
        b = jax.random.uniform(kb, (1, dout), jnp.float32, -bound, bound)
        return w, b

    w1, b1 = lin(ks[0], ks[1], mid, mid)
    w2, b2 = lin(ks[2], ks[3], mid, mid)
    w3, b3 = lin(ks[4], ks[5], mid, num_edge_types + 1)
    return (w1, b1, w2, b2, w3, b3)


if __name__ == "__main__":
    node_dim = 32
    graph_dim = 64
    num_edge_types = 3
    N = 9  # number of nodes -> M = 8 candidate previous nodes, mid = 128

    key = jax.random.PRNGKey(0)
    k_hv, k_g, k_p, k_sample = jax.random.split(key, 4)

    hv = jax.random.normal(k_hv, (N, node_dim), jnp.float32)          # g.ndata['hv']
    graph_embed = jax.random.normal(k_g, (graph_dim,), jnp.float32)   # graph_embed_func(g)
    raw_params = init_params(k_p, graph_dim, node_dim, num_edge_types)
    kparams = prepare_params(raw_params)   # one-time, kernel-ready weights

    # actions=None branch (sample from Categorical(logits)) -- one kernel call
    actions, log_prob = add_edges_forward(hv, graph_embed, kparams,
                                          actions=None, key=k_sample)
    jax.block_until_ready(log_prob)

    # explicit-actions branch -- still one kernel call
    given_actions = jnp.array([0, 1, 2, 0, 3, 0, 1, 0], jnp.int32)
    actions2, log_prob2 = add_edges_forward(hv, graph_embed, kparams,
                                            actions=given_actions)
    jax.block_until_ready(log_prob2)

    # sanity check against a bf16-matched pure-JAX reference (explicit actions)
    w1, b1, w2, b2, w3, b3 = raw_params
    M = N - 1
    x_ref = jnp.concatenate(
        [jnp.broadcast_to(graph_embed[None, :], (M, graph_dim)),
         hv[:M],
         jnp.broadcast_to(hv[N - 1][None, :], (M, node_dim))], axis=1)
    xb = x_ref.astype(jnp.bfloat16)
    h = jnp.maximum(jnp.dot(xb, w1.astype(jnp.bfloat16),
                            preferred_element_type=jnp.float32) + b1, 0.0)
    h = jnp.maximum(jnp.dot(h.astype(jnp.bfloat16), w2.astype(jnp.bfloat16),
                            preferred_element_type=jnp.float32) + b2, 0.0)
    logits_ref = jnp.dot(h.astype(jnp.bfloat16), w3.astype(jnp.bfloat16),
                         preferred_element_type=jnp.float32) + b3
    lp_ref = jnp.sum(jnp.take_along_axis(jax.nn.log_softmax(logits_ref, axis=1),
                                         given_actions[:, None], axis=1))
    assert jnp.allclose(log_prob2, lp_ref, atol=3e-2), (log_prob2, lp_ref)
    assert actions2.shape == (M,) and actions.shape == (M,)

    print("KERNEL_OK")
</pallas_src>

<mosaic_0001>
module attributes {stable_mosaic.version = 11 : i64} {
  func.func @_add_edges_kernel(%arg0: memref<1x64xf32, #tpu.memory_space<vmem>>, %arg1: memref<9x32xf32, #tpu.memory_space<vmem>>, %arg2: memref<3x128x128xbf16, #tpu.memory_space<vmem>>, %arg3: memref<3x128xf32, #tpu.memory_space<vmem>>, %arg4: memref<8x128xf32, #tpu.memory_space<vmem>>) attributes {dimension_semantics = [], scalar_prefetch = 0 : i64, scratch_operands = 0 : i64, tpu.core_type = #tpu.core_type<tc>} {
    %c0 = arith.constant 0 : index
    %c0_0 = arith.constant 0 : index
    %0 = vector.load %arg0[%c0, %c0_0] : memref<1x64xf32, #tpu.memory_space<vmem>>, vector<1x64xf32>
    %1 = arith.truncf %0 : vector<1x64xf32> to vector<1x64xbf16>
    %c0_1 = arith.constant 0 : index
    %c0_2 = arith.constant 0 : index
    %2 = vector.load %arg1[%c0_1, %c0_2] : memref<9x32xf32, #tpu.memory_space<vmem>>, vector<8x32xf32>
    %3 = arith.truncf %2 : vector<8x32xf32> to vector<8x32xbf16>
    %c8 = arith.constant 8 : index
    %c0_3 = arith.constant 0 : index
    %4 = vector.load %arg1[%c8, %c0_3] : memref<9x32xf32, #tpu.memory_space<vmem>>, vector<1x32xf32>
    %5 = arith.truncf %4 : vector<1x32xf32> to vector<1x32xbf16>
    %c0_4 = arith.constant 0 : index
    %c0_5 = arith.constant 0 : index
    %c0_6 = arith.constant 0 : index
    %6 = vector.load %arg2[%c0_4, %c0_5, %c0_6] : memref<3x128x128xbf16, #tpu.memory_space<vmem>>, vector<1x64x128xbf16>
    %7 = vector.shape_cast %6 : vector<1x64x128xbf16> to vector<64x128xbf16>
    %c0_7 = arith.constant 0 : index
    %c64 = arith.constant 64 : index
    %c0_8 = arith.constant 0 : index
    %8 = vector.load %arg2[%c0_7, %c64, %c0_8] : memref<3x128x128xbf16, #tpu.memory_space<vmem>>, vector<1x32x128xbf16>
    %9 = vector.shape_cast %8 : vector<1x32x128xbf16> to vector<32x128xbf16>
    %c0_9 = arith.constant 0 : index
    %c96 = arith.constant 96 : index
    %c0_10 = arith.constant 0 : index
    %10 = vector.load %arg2[%c0_9, %c96, %c0_10] : memref<3x128x128xbf16, #tpu.memory_space<vmem>>, vector<1x32x128xbf16>
    %11 = vector.shape_cast %10 : vector<1x32x128xbf16> to vector<32x128xbf16>
    %c0_11 = arith.constant 0 : index
    %c0_12 = arith.constant 0 : index
    %12 = vector.load %arg3[%c0_11, %c0_12] : memref<3x128xf32, #tpu.memory_space<vmem>>, vector<1x128xf32>
    %cst = arith.constant dense<0.000000e+00> : vector<1x128xf32>
    %13 = tpu.matmul %1, %7, %cst {dimension_numbers = #tpu.dot_dimension_numbers<[1], [0], [0], [1], [0, 0, 1, 1], [], []>} : vector<1x64xbf16>, vector<64x128xbf16>, vector<1x128xf32> -> vector<1x128xf32>
    %14 = arith.addf %12, %13 : vector<1x128xf32>
    %cst_13 = arith.constant dense<0.000000e+00> : vector<1x128xf32>
    %15 = tpu.matmul %5, %11, %cst_13 {dimension_numbers = #tpu.dot_dimension_numbers<[1], [0], [0], [1], [0, 0, 1, 1], [], []>} : vector<1x32xbf16>, vector<32x128xbf16>, vector<1x128xf32> -> vector<1x128xf32>
    %16 = arith.addf %14, %15 : vector<1x128xf32>
    %cst_14 = arith.constant dense<0.000000e+00> : vector<8x128xf32>
    %17 = tpu.matmul %3, %9, %cst_14 {dimension_numbers = #tpu.dot_dimension_numbers<[1], [0], [0], [1], [0, 0, 1, 1], [], []>} : vector<8x32xbf16>, vector<32x128xbf16>, vector<8x128xf32> -> vector<8x128xf32>
    %18 = vector.broadcast %16 : vector<1x128xf32> to vector<8x128xf32>
    %19 = arith.addf %17, %18 : vector<8x128xf32>
    %cst_15 = arith.constant 0.000000e+00 : f32
    %20 = vector.broadcast %cst_15 : f32 to vector<8x128xf32>
    %21 = arith.maximumf %19, %20 : vector<8x128xf32>
    %22 = arith.truncf %21 : vector<8x128xf32> to vector<8x128xbf16>
    %c1 = arith.constant 1 : index
    %c0_16 = arith.constant 0 : index
    %c0_17 = arith.constant 0 : index
    %23 = vector.load %arg2[%c1, %c0_16, %c0_17] : memref<3x128x128xbf16, #tpu.memory_space<vmem>>, vector<1x128x128xbf16>
    %24 = vector.shape_cast %23 : vector<1x128x128xbf16> to vector<128x128xbf16>
    %cst_18 = arith.constant dense<0.000000e+00> : vector<8x128xf32>
    %25 = tpu.matmul %22, %24, %cst_18 {dimension_numbers = #tpu.dot_dimension_numbers<[1], [0], [0], [1], [0, 0, 1, 1], [], []>} : vector<8x128xbf16>, vector<128x128xbf16>, vector<8x128xf32> -> vector<8x128xf32>
    %c1_19 = arith.constant 1 : index
    %c0_20 = arith.constant 0 : index
    %26 = vector.load %arg3[%c1_19, %c0_20] : memref<3x128xf32, #tpu.memory_space<vmem>>, vector<1x128xf32>
    %27 = vector.broadcast %26 : vector<1x128xf32> to vector<8x128xf32>
    %28 = arith.addf %25, %27 : vector<8x128xf32>
    %cst_21 = arith.constant 0.000000e+00 : f32
    %29 = vector.broadcast %cst_21 : f32 to vector<8x128xf32>
    %30 = arith.maximumf %28, %29 : vector<8x128xf32>
    %31 = arith.truncf %30 : vector<8x128xf32> to vector<8x128xbf16>
    %c2 = arith.constant 2 : index
    %c0_22 = arith.constant 0 : index
    %c0_23 = arith.constant 0 : index
    %32 = vector.load %arg2[%c2, %c0_22, %c0_23] : memref<3x128x128xbf16, #tpu.memory_space<vmem>>, vector<1x128x128xbf16>
    %33 = vector.shape_cast %32 : vector<1x128x128xbf16> to vector<128x128xbf16>
    %cst_24 = arith.constant dense<0.000000e+00> : vector<8x128xf32>
    %34 = tpu.matmul %31, %33, %cst_24 {dimension_numbers = #tpu.dot_dimension_numbers<[1], [0], [0], [1], [0, 0, 1, 1], [], []>} : vector<8x128xbf16>, vector<128x128xbf16>, vector<8x128xf32> -> vector<8x128xf32>
    %c2_25 = arith.constant 2 : index
    %c0_26 = arith.constant 0 : index
    %35 = vector.load %arg3[%c2_25, %c0_26] : memref<3x128xf32, #tpu.memory_space<vmem>>, vector<1x128xf32>
    %36 = vector.broadcast %35 : vector<1x128xf32> to vector<8x128xf32>
    %37 = arith.addf %34, %36 : vector<8x128xf32>
    %cst_27 = arith.constant dense<0xFF800000> : vector<8xf32>
    %38 = vector.multi_reduction <maximumf>, %37, %cst_27 [1] : vector<8x128xf32> to vector<8xf32>
    %39 = vector.shape_cast %38 : vector<8xf32> to vector<8x1xf32>
    %40 = vector.broadcast %39 : vector<8x1xf32> to vector<8x128xf32>
    %41 = arith.subf %37, %40 : vector<8x128xf32>
    %42 = math.exp %41 : vector<8x128xf32>
    %cst_28 = arith.constant dense<0.000000e+00> : vector<8xf32>
    %43 = vector.multi_reduction <add>, %42, %cst_28 [1] : vector<8x128xf32> to vector<8xf32>
    %44 = vector.shape_cast %43 : vector<8xf32> to vector<8x1xf32>
    %45 = math.log %44 : vector<8x1xf32>
    %46 = vector.broadcast %45 : vector<8x1xf32> to vector<8x128xf32>
    %47 = arith.subf %41, %46 : vector<8x128xf32>
    %c0_29 = arith.constant 0 : index
    %c0_30 = arith.constant 0 : index
    %48 = vector.load %arg4[%c0_29, %c0_30] : memref<8x128xf32, #tpu.memory_space<vmem>>, vector<8x128xf32>
    tpu.vector_store %arg4[%c0_29, %c0_30], %47 {strides = array<i32>} : memref<8x128xf32, #tpu.memory_space<vmem>>, vector<8x128xf32>,
    return
  }
}

</mosaic_0001>

<llo_original>
// kernel: tpu_custom_call.1
$region0: #{tpu_custom_call.1}
  #allocation0 [shape = 'u32[]', space=smem, size = 0x4, offset = 0x4, fixed_abs, tag = 'smem constant byte address 0x4 - core index']
  #allocation1 [shape = 'u32[144,128]{1,0:T(1,128)}', space=vmem, size = 0x12000, scoped, tag = 'internal scratch']
  %s0 = inlined_call_operand.hbm [shape: f32[1,64], index: 0, kind: input, shape index: {}]
  %s1 = inlined_call_operand.hbm [shape: f32[9,32], index: 1, kind: input, shape index: {}]
  %s2 = inlined_call_operand.hbm [shape: bf16[3,128,128], index: 2, kind: input, shape index: {}]
  %s3 = inlined_call_operand.vmem [shape: f32[3,128], index: 3, kind: input, shape index: {}]
  %s4 = inlined_call_operand.hbm [shape: f32[8,128], index: 4, kind: output, shape index: {}]
  %s5 = sld [smem:[#allocation0]]
  $region38: #{tpu_custom_call.1} parent=0
    _
  %s7 = ssub.s32 1, %s5
  %s8 = scalar_select 0, %s7, %s5
  $region1: #{tpu_custom_call.1} parent=0
    #allocation2 [shape = 'u8[512]{0}', space=vmem, size = 0x400, scoped, tag = 'input window, operand 0, single buffered']
    #allocation3 [shape = 's32[1]{0}', space=sflag, size = 0x4, scoped, tag = 'scoped memory for tpu_custom_call.1']
    #allocation4 [shape = 's32[1]{0}', space=sflag, size = 0x4, scoped, tag = 'scoped memory for tpu_custom_call.1']
    #allocation5 [shape = 'u8[8192]{0}', space=vmem, size = 0x2000, scoped, tag = 'input window, operand 1, single buffered']
    #allocation6 [shape = 's32[1]{0}', space=sflag, size = 0x4, scoped, tag = 'scoped memory for tpu_custom_call.1']
    #allocation7 [shape = 'u8[98304]{0}', space=vmem, size = 0x18000, scoped, tag = 'input window, operand 2, single buffered']
    #allocation8 [shape = 'u8[4096]{0}', space=vmem, size = 0x1000, scoped, tag = 'output window, operand 0, single buffered']
    %9 = vsyncpa [#allocation3], 0
    %10 = vsyncpa [#allocation6], 0
    %11 = vsyncpa [#allocation4], 0
    // Predicated region
    $region2: #{tpu_custom_call.1} parent=1 // pred_check
      _
    $region3: #{tpu_custom_call.1} parent=1 // pred_check_branch
      %13 = sbr.rel (0) target = $region5
    $region4: #{tpu_custom_call.1} parent=1 // pred_region
      %s15 = ssub.s32 16, 16
      %16 = vsyncadd [#allocation3], %s15
      %s18 = sshll.u32 [#allocation2], 4
      %s19 = int_to_ptr.vmem [resolvable:$true] %s18
      %21 = dma.hbm_to_vmem [thread:$0]  %s0, 16, %s19, [#allocation3]
    $region5: #{tpu_custom_call.1} parent=1 // pred_fallthru
      _
    // Predicated region
    $region6: #{tpu_custom_call.1} parent=1 // pred_check
      _
    $region7: #{tpu_custom_call.1} parent=1 // pred_check_branch
      %23 = sbr.rel (0) target = $region9
    $region8: #{tpu_custom_call.1} parent=1 // pred_region
      %s25 = ssub.s32 256, 256
      %26 = vsyncadd [#allocation6], %s25
      %s27 = sshll.u32 [#allocation5], 4
      %s28 = int_to_ptr.vmem [resolvable:$true] %s27
      %33 = dma.hbm_to_vmem [thread:$0]  %s1, 256, %s28, [#allocation6], 128, 128, 8
    $region9: #{tpu_custom_call.1} parent=1 // pred_fallthru
      _
    // Predicated region
    $region10: #{tpu_custom_call.1} parent=1 // pred_check
      _
    $region11: #{tpu_custom_call.1} parent=1 // pred_check_branch
      %35 = sbr.rel (0) target = $region13
    $region12: #{tpu_custom_call.1} parent=1 // pred_region
      %s37 = ssub.s32 3072, 3072
      %38 = vsyncadd [#allocation6], %s37
      %s39 = sshll.u32 [#allocation7], 4
      %s40 = int_to_ptr.vmem [resolvable:$true] %s39
      %45 = dma.hbm_to_vmem [thread:$0]  %s2, 3072, %s40, [#allocation6], 64, 64, 4
    $region13: #{tpu_custom_call.1} parent=1 // pred_fallthru
      _
    // Predicated region
    $region14: #{tpu_custom_call.1} parent=1 // pred_check
      _
    $region15: #{tpu_custom_call.1} parent=1 // pred_check_branch
      %47 = sbr.rel (0) target = $region17
    $region16: #{tpu_custom_call.1} parent=1 // pred_region
      _
    $region17: #{tpu_custom_call.1} parent=1 // pred_fallthru
      _
    // Predicated region
    $region18: #{tpu_custom_call.1} parent=1 // pred_check
      _
    $region19: #{tpu_custom_call.1} parent=1 // pred_check_branch
      %49 = sbr.rel (0) target = $region21
    $region20: #{tpu_custom_call.1} parent=1 // pred_region
      %50 = dma.done [#allocation3], 16
    $region21: #{tpu_custom_call.1} parent=1 // pred_fallthru
      _
    // Predicated region
    $region22: #{tpu_custom_call.1} parent=1 // pred_check
      _
    $region23: #{tpu_custom_call.1} parent=1 // pred_check_branch
      %52 = sbr.rel (0) target = $region25
    $region24: #{tpu_custom_call.1} parent=1 // pred_region
      %53 = dma.done [#allocation6], 256
    $region25: #{tpu_custom_call.1} parent=1 // pred_fallthru
      _
    // Predicated region
    $region26: #{tpu_custom_call.1} parent=1 // pred_check
      _
    $region27: #{tpu_custom_call.1} parent=1 // pred_check_branch
      %55 = sbr.rel (0) target = $region29
    $region28: #{tpu_custom_call.1} parent=1 // pred_region
      %56 = dma.done [#allocation6], 3072
    $region29: #{tpu_custom_call.1} parent=1 // pred_fallthru
      _
    %v58 = vld [vmem:[#allocation2] sm:$0x1]
    %v59 = vpack.c.bf16 %v58, %v58
    %v60 = vld [vmem:[#allocation5] sm:$0xff]
    %v61 = vpack.c.bf16 %v60, %v60
    %v62 = vld [vmem:[#allocation5 + $0x8] sm:$0x1]
    %v63 = vpack.c.bf16 %v62, %v62
    %v64 = vld [vmem:[#allocation7] sm:$0xf]
    %v65 = vld [vmem:[#allocation7 + $0x4] sm:$0xf]
    %v66 = vld [vmem:[#allocation7 + $0x8] sm:$0xf]
    %v67 = vld [vmem:[#allocation7 + $0xc] sm:$0xf]
    %v68 = vld [vmem:[#allocation7 + $0x10] sm:$0xf]
    %v69 = vld [vmem:[#allocation7 + $0x14] sm:$0xf]
    %v70 = vld [vmem:[#allocation7 + $0x18] sm:$0xf]
    %v71 = vld [vmem:[#allocation7 + $0x1c] sm:$0xf]
    %v72 = vld [vmem:[#allocation7 + $0x20] sm:$0xf]
    %v73 = vld [vmem:[#allocation7 + $0x24] sm:$0xf]
    %v74 = vld [vmem:[#allocation7 + $0x28] sm:$0xf]
    %v75 = vld [vmem:[#allocation7 + $0x2c] sm:$0xf]
    %v76 = vld [vmem:[#allocation7 + $0x30] sm:$0xf]
    %v77 = vld [vmem:[#allocation7 + $0x34] sm:$0xf]
    %v78 = vld [vmem:[#allocation7 + $0x38] sm:$0xf]
    %v79 = vld [vmem:[#allocation7 + $0x3c] sm:$0xf]
    %v80 = vld [vmem:[%s3] sm:$0x1]
    %v89 = vunpack.c.l.b16 %v64
    %v90 = vunpack.c.l.b16 %v65
    %v91 = vunpack.c.l.b16 %v66
    %v92 = vunpack.c.l.b16 %v67
    %v93 = vunpack.c.l.b16 %v68
    %v94 = vunpack.c.l.b16 %v69
    %v95 = vunpack.c.l.b16 %v70
    %v96 = vunpack.c.l.b16 %v71
    %v97 = vpack.c.b16 %v90, %v89
    %v98 = vpack.c.b16 %v92, %v91
    %v99 = vpack.c.b16 %v94, %v93
    %v100 = vpack.c.b16 %v96, %v95
    %vm105 = vcmask 523264
    %v107 = vsel %vm105, %v59, 0
    %109 = vmatprep.subr.bf16.mxu0 0
    %110 = vmatpush1.bf16.msra.mxu0 %v97
    %111 = vmatprep.subr.bf16.mxu0 0
    %112 = vmatpush1.bf16.msra.mxu0 %v98
    %113 = vmatprep.subr.bf16.mxu0 0
    %114 = vmatpush1.bf16.msra.mxu0 %v99
    %115 = vmatprep.subr.bf16.mxu0 0
    %116 = vmatpush1.bf16.msra.mxu0 %v100
    %117 = vmatprep.subr.bf16.mxu0 0
    %118 = vmatpush1.bf16.msra.mxu0 0
    %119 = vmatprep.subr.bf16.mxu0 0
    %120 = vmatpush1.bf16.msra.mxu0 0
    %121 = vmatprep.subr.bf16.mxu0 0
    %122 = vmatpush1.bf16.msra.mxu0 0
    %123 = vmatprep.subr.bf16.mxu0 0
    %124 = vmatpush1.bf16.msra.mxu0 0
    %125 = vmatprep.subr.bf16.mxu0 0
    %126 = vmatpush1.bf16.msra.mxu0 0
    %127 = vmatprep.subr.bf16.mxu0 0
    %128 = vmatpush1.bf16.msra.mxu0 0
    %129 = vmatprep.subr.bf16.mxu0 0
    %130 = vmatpush1.bf16.msra.mxu0 0
    %131 = vmatprep.subr.bf16.mxu0 0
    %132 = vmatpush1.bf16.msra.mxu0 0
    %133 = vmatprep.subr.bf16.mxu0 0
    %134 = vmatpush1.bf16.msra.mxu0 0
    %135 = vmatprep.subr.bf16.mxu0 0
    %136 = vmatpush1.bf16.msra.mxu0 0
    %137 = vmatprep.subr.bf16.mxu0 0
    %138 = vmatpush1.bf16.msra.mxu0 0
    %139 = vmatprep.subr.bf16.mxu0 0
    %140 = vmatpush1.bf16.msra.mxu0 0
    %141 = vmatprep.mubr.bf16.mxu0 0
    %142 = vmatmul.mubr.bf16.gmra.mrb[0].mxu0 %v107
    %v143 = vpop.f32.mrb[0].mxu0
    %v144 = vadd.f32 0.0, %v143
    %v145 = vpop.f32.mrb[0].mxu0
    %v146 = vpop.f32.mrb[0].mxu0
    %v147 = vpop.f32.mrb[0].mxu0
    %148 = vdwg.mxu0
    %v149 = vadd.f32 %v80, %v144
    %v154 = vunpack.c.l.b16 %v76
    %v155 = vunpack.c.l.b16 %v77
    %v156 = vunpack.c.l.b16 %v78
    %v157 = vunpack.c.l.b16 %v79
    %v158 = vpack.c.b16 %v155, %v154
    %v159 = vpack.c.b16 %v157, %v156
    %vm162 = vcmask 261120
    %v164 = vsel %vm162, %v63, 0
    %166 = vmatprep.subr.bf16.mxu0 0
    %167 = vmatpush1.bf16.msra.mxu0 %v158
    %168 = vmatprep.subr.bf16.mxu0 0
    %169 = vmatpush1.bf16.msra.mxu0 %v159
    %170 = vmatprep.subr.bf16.mxu0 0
    %171 = vmatpush1.bf16.msra.mxu0 0
    %172 = vmatprep.subr.bf16.mxu0 0
    %173 = vmatpush1.bf16.msra.mxu0 0
    %174 = vmatprep.subr.bf16.mxu0 0
    %175 = vmatpush1.bf16.msra.mxu0 0
    %176 = vmatprep.subr.bf16.mxu0 0
    %177 = vmatpush1.bf16.msra.mxu0 0
    %178 = vmatprep.subr.bf16.mxu0 0
    %179 = vmatpush1.bf16.msra.mxu0 0
    %180 = vmatprep.subr.bf16.mxu0 0
    %181 = vmatpush1.bf16.msra.mxu0 0
    %182 = vmatprep.subr.bf16.mxu0 0
    %183 = vmatpush1.bf16.msra.mxu0 0
    %184 = vmatprep.subr.bf16.mxu0 0
    %185 = vmatpush1.bf16.msra.mxu0 0
    %186 = vmatprep.subr.bf16.mxu0 0
    %187 = vmatpush1.bf16.msra.mxu0 0
    %188 = vmatprep.subr.bf16.mxu0 0
    %189 = vmatpush1.bf16.msra.mxu0 0
    %190 = vmatprep.subr.bf16.mxu0 0
    %191 = vmatpush1.bf16.msra.mxu0 0
    %192 = vmatprep.subr.bf16.mxu0 0
    %193 = vmatpush1.bf16.msra.mxu0 0
    %194 = vmatprep.subr.bf16.mxu0 0
    %195 = vmatpush1.bf16.msra.mxu0 0
    %196 = vmatprep.subr.bf16.mxu0 0
    %197 = vmatpush1.bf16.msra.mxu0 0
    %198 = vmatprep.mubr.bf16.mxu0 0
    %199 = vmatmul.mubr.bf16.gmra.mrb[0].mxu0 %v164
    %v200 = vpop.f32.mrb[0].mxu0
    %v201 = vadd.f32 0.0, %v200
    %v202 = vpop.f32.mrb[0].mxu0
    %v203 = vpop.f32.mrb[0].mxu0
    %v204 = vpop.f32.mrb[0].mxu0
    %205 = vdwg.mxu0
    %v206 = vadd.f32 %v149, %v201
    %v207 = vlaneseq
    %v208 = vshrl.u32 %v207, 7
    %v209 = vsub.s32 0, %v208
    %v210 = vrot.slane %v206, %v209
    %v215 = vunpack.c.l.b16 %v72
    %v216 = vunpack.c.l.b16 %v73
    %v217 = vunpack.c.l.b16 %v74
    %v218 = vunpack.c.l.b16 %v75
    %v219 = vpack.c.b16 %v216, %v215
    %v220 = vpack.c.b16 %v218, %v217
    %v224 = vsel %vm162, %v61, 0
    %226 = vmatprep.subr.bf16.mxu0 0
    %227 = vmatpush1.bf16.msra.mxu0 %v219
    %228 = vmatprep.subr.bf16.mxu0 0
    %229 = vmatpush1.bf16.msra.mxu0 %v220
    %230 = vmatprep.subr.bf16.mxu0 0
    %231 = vmatpush1.bf16.msra.mxu0 0
    %232 = vmatprep.subr.bf16.mxu0 0
    %233 = vmatpush1.bf16.msra.mxu0 0
    %234 = vmatprep.subr.bf16.mxu0 0
    %235 = vmatpush1.bf16.msra.mxu0 0
    %236 = vmatprep.subr.bf16.mxu0 0
    %237 = vmatpush1.bf16.msra.mxu0 0
    %238 = vmatprep.subr.bf16.mxu0 0
    %239 = vmatpush1.bf16.msra.mxu0 0
    %240 = vmatprep.subr.bf16.mxu0 0
    %241 = vmatpush1.bf16.msra.mxu0 0
    %242 = vmatprep.subr.bf16.mxu0 0
    %243 = vmatpush1.bf16.msra.mxu0 0
    %244 = vmatprep.subr.bf16.mxu0 0
    %245 = vmatpush1.bf16.msra.mxu0 0
    %246 = vmatprep.subr.bf16.mxu0 0
    %247 = vmatpush1.bf16.msra.mxu0 0
    %248 = vmatprep.subr.bf16.mxu0 0
    %249 = vmatpush1.bf16.msra.mxu0 0
    %250 = vmatprep.subr.bf16.mxu0 0
    %251 = vmatpush1.bf16.msra.mxu0 0
    %252 = vmatprep.subr.bf16.mxu0 0
    %253 = vmatpush1.bf16.msra.mxu0 0
    %254 = vmatprep.subr.bf16.mxu0 0
    %255 = vmatpush1.bf16.msra.mxu0 0
    %256 = vmatprep.subr.bf16.mxu0 0
    %257 = vmatpush1.bf16.msra.mxu0 0
    %258 = vmatprep.mubr.bf16.mxu0 0
    %259 = vmatmul.mubr.bf16.gmra.mrb[0].mxu0 %v224
    %v260 = vpop.f32.mrb[0].mxu0
    %v261 = vadd.f32 %v210, %v260
    %v262 = vpop.f32.mrb[0].mxu0
    %v263 = vpop.f32.mrb[0].mxu0
    %v264 = vpop.f32.mrb[0].mxu0
    %265 = vdwg.mxu0
    %v266 = vmax.f32 %v261, 0.0
    %v267 = vpack.c.bf16 %v266, %v266
    %s268 = scalar_lea.vmem [#allocation7], 64
    %v269 = vld [vmem:[%s268] sm:$0xf]
    %v270 = vld [vmem:[%s268 + $0x4] sm:$0xf]
    %v271 = vld [vmem:[%s268 + $0x8] sm:$0xf]
    %v272 = vld [vmem:[%s268 + $0xc] sm:$0xf]
    %v273 = vld [vmem:[%s268 + $0x10] sm:$0xf]
    %v274 = vld [vmem:[%s268 + $0x14] sm:$0xf]
    %v275 = vld [vmem:[%s268 + $0x18] sm:$0xf]
    %v276 = vld [vmem:[%s268 + $0x1c] sm:$0xf]
    %v277 = vld [vmem:[%s268 + $0x20] sm:$0xf]
    %v278 = vld [vmem:[%s268 + $0x24] sm:$0xf]
    %v279 = vld [vmem:[%s268 + $0x28] sm:$0xf]
    %v280 = vld [vmem:[%s268 + $0x2c] sm:$0xf]
    %v281 = vld [vmem:[%s268 + $0x30] sm:$0xf]
    %v282 = vld [vmem:[%s268 + $0x34] sm:$0xf]
    %v283 = vld [vmem:[%s268 + $0x38] sm:$0xf]
    %v284 = vld [vmem:[%s268 + $0x3c] sm:$0xf]
    %v285 = vld [vmem:[%s3 + $0x1] sm:$0x1]
    %v286 = vlaneseq
    %v287 = vshrl.u32 %v286, 7
    %v288 = vsub.s32 0, %v287
    %v289 = vrot.slane %v285, %v288
    %v306 = vunpack.c.l.b16 %v269
    %v307 = vunpack.c.l.b16 %v270
    %v308 = vunpack.c.l.b16 %v271
    %v309 = vunpack.c.l.b16 %v272
    %v310 = vunpack.c.l.b16 %v273
    %v311 = vunpack.c.l.b16 %v274
    %v312 = vunpack.c.l.b16 %v275
    %v313 = vunpack.c.l.b16 %v276
    %v314 = vunpack.c.l.b16 %v277
    %v315 = vunpack.c.l.b16 %v278
    %v316 = vunpack.c.l.b16 %v279
    %v317 = vunpack.c.l.b16 %v280
    %v318 = vunpack.c.l.b16 %v281
    %v319 = vunpack.c.l.b16 %v282
    %v320 = vunpack.c.l.b16 %v283
    %v321 = vunpack.c.l.b16 %v284
    %v322 = vpack.c.b16 %v307, %v306
    %v323 = vpack.c.b16 %v309, %v308
    %v324 = vpack.c.b16 %v311, %v310
    %v325 = vpack.c.b16 %v313, %v312
    %v326 = vpack.c.b16 %v315, %v314
    %v327 = vpack.c.b16 %v317, %v316
    %v328 = vpack.c.b16 %v319, %v318
    %v329 = vpack.c.b16 %v321, %v320
    %338 = vmatprep.subr.bf16.mxu0 0
    %339 = vmatpush1.bf16.msra.mxu0 %v322
    %340 = vmatprep.subr.bf16.mxu0 0
    %341 = vmatpush1.bf16.msra.mxu0 %v323
    %342 = vmatprep.subr.bf16.mxu0 0
    %343 = vmatpush1.bf16.msra.mxu0 %v324
    %344 = vmatprep.subr.bf16.mxu0 0
    %345 = vmatpush1.bf16.msra.mxu0 %v325
    %346 = vmatprep.subr.bf16.mxu0 0
    %347 = vmatpush1.bf16.msra.mxu0 %v326
    %348 = vmatprep.subr.bf16.mxu0 0
    %349 = vmatpush1.bf16.msra.mxu0 %v327
    %350 = vmatprep.subr.bf16.mxu0 0
    %351 = vmatpush1.bf16.msra.mxu0 %v328
    %352 = vmatprep.subr.bf16.mxu0 0
    %353 = vmatpush1.bf16.msra.mxu0 %v329
    %354 = vmatprep.subr.bf16.mxu0 0
    %355 = vmatpush1.bf16.msra.mxu0 0
    %356 = vmatprep.subr.bf16.mxu0 0
    %357 = vmatpush1.bf16.msra.mxu0 0
    %358 = vmatprep.subr.bf16.mxu0 0
    %359 = vmatpush1.bf16.msra.mxu0 0
    %360 = vmatprep.subr.bf16.mxu0 0
    %361 = vmatpush1.bf16.msra.mxu0 0
    %362 = vmatprep.subr.bf16.mxu0 0
    %363 = vmatpush1.bf16.msra.mxu0 0
    %364 = vmatprep.subr.bf16.mxu0 0
    %365 = vmatpush1.bf16.msra.mxu0 0
    %366 = vmatprep.subr.bf16.mxu0 0
    %367 = vmatpush1.bf16.msra.mxu0 0
    %368 = vmatprep.subr.bf16.mxu0 0
    %369 = vmatpush1.bf16.msra.mxu0 0
    %370 = vmatprep.mubr.bf16.mxu0 0
    %371 = vmatmul.mubr.bf16.gmra.mrb[0].mxu0 %v267
    %v372 = vpop.f32.mrb[0].mxu0
    %v373 = vadd.f32 %v289, %v372
    %v374 = vpop.f32.mrb[0].mxu0
    %v375 = vpop.f32.mrb[0].mxu0
    %v376 = vpop.f32.mrb[0].mxu0
    %377 = vdwg.mxu0
    %v378 = vmax.f32 %v373, 0.0
    %v379 = vpack.c.bf16 %v378, %v378
    %s380 = scalar_lea.vmem [#allocation7], 128
    %v381 = vld [vmem:[%s380] sm:$0xf]
    %v382 = vld [vmem:[%s380 + $0x4] sm:$0xf]
    %v383 = vld [vmem:[%s380 + $0x8] sm:$0xf]
    %v384 = vld [vmem:[%s380 + $0xc] sm:$0xf]
    %v385 = vld [vmem:[%s380 + $0x10] sm:$0xf]
    %v386 = vld [vmem:[%s380 + $0x14] sm:$0xf]
    %v387 = vld [vmem:[%s380 + $0x18] sm:$0xf]
    %v388 = vld [vmem:[%s380 + $0x1c] sm:$0xf]
    %v389 = vld [vmem:[%s380 + $0x20] sm:$0xf]
    %v390 = vld [vmem:[%s380 + $0x24] sm:$0xf]
    %v391 = vld [vmem:[%s380 + $0x28] sm:$0xf]
    %v392 = vld [vmem:[%s380 + $0x2c] sm:$0xf]
    %v393 = vld [vmem:[%s380 + $0x30] sm:$0xf]
    %v394 = vld [vmem:[%s380 + $0x34] sm:$0xf]
    %v395 = vld [vmem:[%s380 + $0x38] sm:$0xf]
    %v396 = vld [vmem:[%s380 + $0x3c] sm:$0xf]
    %v397 = vld [vmem:[%s3 + $0x2] sm:$0x1]
    %v398 = vlaneseq
    %v399 = vshrl.u32 %v398, 7
    %v400 = vsub.s32 0, %v399
    %v401 = vrot.slane %v397, %v400
    %v418 = vunpack.c.l.b16 %v381
    %v419 = vunpack.c.l.b16 %v382
    %v420 = vunpack.c.l.b16 %v383
    %v421 = vunpack.c.l.b16 %v384
    %v422 = vunpack.c.l.b16 %v385
    %v423 = vunpack.c.l.b16 %v386
    %v424 = vunpack.c.l.b16 %v387
    %v425 = vunpack.c.l.b16 %v388
    %v426 = vunpack.c.l.b16 %v389
    %v427 = vunpack.c.l.b16 %v390
    %v428 = vunpack.c.l.b16 %v391
    %v429 = vunpack.c.l.b16 %v392
    %v430 = vunpack.c.l.b16 %v393
    %v431 = vunpack.c.l.b16 %v394
    %v432 = vunpack.c.l.b16 %v395
    %v433 = vunpack.c.l.b16 %v396
    %v434 = vpack.c.b16 %v419, %v418
    %v435 = vpack.c.b16 %v421, %v420
    %v436 = vpack.c.b16 %v423, %v422
    %v437 = vpack.c.b16 %v425, %v424
    %v438 = vpack.c.b16 %v427, %v426
    %v439 = vpack.c.b16 %v429, %v428
    %v440 = vpack.c.b16 %v431, %v430
    %v441 = vpack.c.b16 %v433, %v432
    %450 = vmatprep.subr.bf16.mxu0 0
    %451 = vmatpush1.bf16.msra.mxu0 %v434
    %452 = vmatprep.subr.bf16.mxu0 0
    %453 = vmatpush1.bf16.msra.mxu0 %v435
    %454 = vmatprep.subr.bf16.mxu0 0
    %455 = vmatpush1.bf16.msra.mxu0 %v436
    %456 = vmatprep.subr.bf16.mxu0 0
    %457 = vmatpush1.bf16.msra.mxu0 %v437
    %458 = vmatprep.subr.bf16.mxu0 0
    %459 = vmatpush1.bf16.msra.mxu0 %v438
    %460 = vmatprep.subr.bf16.mxu0 0
    %461 = vmatpush1.bf16.msra.mxu0 %v439
    %462 = vmatprep.subr.bf16.mxu0 0
    %463 = vmatpush1.bf16.msra.mxu0 %v440
    %464 = vmatprep.subr.bf16.mxu0 0
    %465 = vmatpush1.bf16.msra.mxu0 %v441
    %466 = vmatprep.subr.bf16.mxu0 0
    %467 = vmatpush1.bf16.msra.mxu0 0
    %468 = vmatprep.subr.bf16.mxu0 0
    %469 = vmatpush1.bf16.msra.mxu0 0
    %470 = vmatprep.subr.bf16.mxu0 0
    %471 = vmatpush1.bf16.msra.mxu0 0
    %472 = vmatprep.subr.bf16.mxu0 0
    %473 = vmatpush1.bf16.msra.mxu0 0
    %474 = vmatprep.subr.bf16.mxu0 0
    %475 = vmatpush1.bf16.msra.mxu0 0
    %476 = vmatprep.subr.bf16.mxu0 0
    %477 = vmatpush1.bf16.msra.mxu0 0
    %478 = vmatprep.subr.bf16.mxu0 0
    %479 = vmatpush1.bf16.msra.mxu0 0
    %480 = vmatprep.subr.bf16.mxu0 0
    %481 = vmatpush1.bf16.msra.mxu0 0
    %482 = vmatprep.mubr.bf16.mxu0 0
    %483 = vmatmul.mubr.bf16.gmra.mrb[0].mxu0 %v379
    %v484 = vpop.f32.mrb[0].mxu0
    %v485 = vadd.f32 %v401, %v484
    %v486 = vpop.f32.mrb[0].mxu0
    %v487 = vpop.f32.mrb[0].mxu0
    %v488 = vpop.f32.mrb[0].mxu0
    %489 = vdwg.mxu0
    %490 = vmax.xlane.f32.xlu0 %v485
    %v491 = vpop.xlane.xlu0 %490
    %v492 = vsub.f32 %v485, %v491
    %v493 = vmul.f32 %v492, 1.442695
    %v494 = vpow.pop %v493
    %495 = vadd.xlane.f32.xlu0 %v494
    %v496 = vpop.xlane.xlu0 %495
    %v497 = vlog2.pop %v496
    %v498 = vmul.f32 %v497, 0.6931472
    %v499 = vsub.f32 %v492, %v498
    %500 = vst [vmem:[#allocation8] sm:$0xff] %v499
    // Predicated region
    $region30: #{tpu_custom_call.1} parent=1 // pred_check
      _
    $region31: #{tpu_custom_call.1} parent=1 // pred_check_branch
      %502 = sbr.rel (0) target = $region33
    $region32: #{tpu_custom_call.1} parent=1 // pred_region
      %s504 = ssub.s32 128, 128
      %505 = vsyncadd [#allocation4], %s504
      %s507 = sshll.u32 [#allocation8], 4
      %s508 = int_to_ptr.vmem [resolvable:$true] %s507
      %510 = dma.vmem_to_hbm [thread:$0]  %s508, 128, %s4, [#allocation4]
    $region33: #{tpu_custom_call.1} parent=1 // pred_fallthru
      _
    // Predicated region
    $region34: #{tpu_custom_call.1} parent=1 // pred_check
      _
    $region35: #{tpu_custom_call.1} parent=1 // pred_check_branch
      %512 = sbr.rel (0) target = $region37
    $region36: #{tpu_custom_call.1} parent=1 // pred_region
      %513 = dma.done [#allocation4], 128
    $region37: #{tpu_custom_call.1} parent=1 // pred_fallthru
      _
    %514 = vsyncpa [#allocation3], 1
    %515 = vsyncpa [#allocation6], 1
    %516 = vsyncpa [#allocation4], 1

</llo_original>
